<compile_context>
chip_gen: v5e
topology: v5e:2x2
jax: 0.10.0
libtpu: 0.0.40
codegen_flags: <defaults>
</compile_context>

<pallas_src>
import jax
import jax.numpy as jnp
from jax.experimental import pallas as pl
from jax.experimental.pallas import tpu as pltpu


D_PAD = 128   # common padded dim for features (66 -> 128) and state (32 -> 128)


# ----------------------------------------------------------------------------
# Pallas kernel: one tile of polygons per grid step.
#   x   : [tile_poly, points, D]  zero-padded sampled-features + scaled coords (f32)
#   w   : [4, D, D]               packed (wh, w1, w2, wp), zero-padded, bf16
#   b   : [4, 1, D]               packed (bh, b1, b2, bp), zero-padded, f32
#   out : [tile_poly, points, D]  per-point offsets live in lanes 0..1
# ----------------------------------------------------------------------------
def _gcn_kernel(x_ref, w_ref, b_ref, out_ref):
    tp, pts, d = x_ref.shape
    rows = tp * pts

    def agg(h2):
        # 3-tap circular neighbour average per polygon (== row-normalised
        # circular adjacency matmul), done on the XLU instead of the MXU.
        h3 = h2.reshape(tp, pts, d)
        nb = h3 + pltpu.roll(h3, 1, axis=1) + pltpu.roll(h3, pts - 1, axis=1)
        return (nb * (1.0 / 3.0)).reshape(rows, d)

    def gconv(h2, layer):
        ah = agg(h2).astype(jnp.bfloat16)                        # bf16 MXU operand
        return (jnp.dot(ah, w_ref[layer],
                        preferred_element_type=jnp.float32)       # f32 accumulation
                + b_ref[layer])                                    # [rows, D] f32

    x2 = x_ref[...].reshape(rows, d)
    # head graph-conv
    h = jnp.maximum(gconv(x2, 0), 0.0)
    # two residual graph-conv blocks
    h = h + jnp.maximum(gconv(h, 1), 0.0)
    h = h + jnp.maximum(gconv(h, 2), 0.0)
    # prediction head (1x1 conv == per-point linear); lanes >= 2 stay zero
    out = (jnp.dot(h.astype(jnp.bfloat16), w_ref[3],
                   preferred_element_type=jnp.float32) + b_ref[3])
    out_ref[...] = out.reshape(tp, pts, d)


def gcn_forward(x, w_slab, b_slab):
    """x: [N_poly, points, F] float32 -> offsets [N_poly, points, 2] float32."""
    n_poly, points, feat = x.shape
    d_pad = w_slab.shape[1]
    assert feat <= d_pad
    assert points % 8 == 0, "points must be a multiple of 8 for sublane tiling"

    # ~256-row M tiles (good MXU fill on v6e/v7x); multiple of `points` so the
    # circular roll never wraps across polygon boundaries.
    tile_poly = max(1, min(n_poly, 256 // points))
    n_pad = ((n_poly + tile_poly - 1) // tile_poly) * tile_poly

    x3 = jnp.pad(x.astype(jnp.float32),
                 ((0, n_pad - n_poly), (0, 0), (0, d_pad - feat)))

    rows_total = n_pad * points
    flops = 2 * 4 * rows_total * d_pad * d_pad
    bytes_accessed = (x3.size * 4 + w_slab.size * 2 + b_slab.size * 4
                      + rows_total * d_pad * 4)

    out = pl.pallas_call(
        _gcn_kernel,
        out_shape=jax.ShapeDtypeStruct((n_pad, points, d_pad), jnp.float32),
        grid=(n_pad // tile_poly,),
        in_specs=[
            pl.BlockSpec((tile_poly, points, d_pad), lambda i: (i, 0, 0)),  # features
            pl.BlockSpec((4, d_pad, d_pad), lambda i: (0, 0, 0)),           # bf16 weights
            pl.BlockSpec((4, 1, d_pad), lambda i: (0, 0, 0)),               # f32 biases
        ],
        out_specs=pl.BlockSpec((tile_poly, points, d_pad), lambda i: (i, 0, 0)),
        compiler_params=pltpu.CompilerParams(
            dimension_semantics=("parallel",)),
        cost_estimate=pl.CostEstimate(flops=flops, transcendentals=0,
                                      bytes_accessed=bytes_accessed),
    )(x3, w_slab, b_slab)

    return out[:n_poly, :, :2]


# ----------------------------------------------------------------------------
# Host-side packing of GCN parameters into zero-padded slabs (weights bf16)
# ----------------------------------------------------------------------------
def pack_gcn_params(params, d_pad=D_PAD):
    def pad_w(w):
        out = jnp.zeros((d_pad, d_pad), jnp.float32)
        return out.at[: w.shape[0], : w.shape[1]].set(w.astype(jnp.float32))

    def pad_b(b):
        out = jnp.zeros((1, d_pad), jnp.float32)
        return out.at[:, : b.shape[1]].set(b.astype(jnp.float32))

    w_slab = jnp.stack([pad_w(params["wh"]), pad_w(params["w1"]),
                        pad_w(params["w2"]), pad_w(params["wp"])]
                       ).astype(jnp.bfloat16)                        # [4, D, D] bf16
    b_slab = jnp.stack([pad_b(params["bh"]), pad_b(params["b1"]),
                        pad_b(params["b2"]), pad_b(params["bp"])])   # [4, 1, D] f32
    return w_slab, b_slab


# ----------------------------------------------------------------------------
# Plain-JAX glue (mirrors gcn_utils helpers)
# ----------------------------------------------------------------------------
def img_poly_to_can_poly(img_poly):
    """Canonical polygon: subtract per-polygon (x_min, y_min)."""
    mins = jnp.min(img_poly, axis=1, keepdims=True)
    return img_poly - mins


def get_gcn_feature(cnn_feature, img_poly, ind, h, w):
    """Bilinear sampling of NCHW features at polygon vertices (grid_sample semantics,
    align_corners=False, zero padding).  Data-dependent gather -> kept in plain JAX.
    Returns [N_poly, points, C]."""
    x = img_poly[..., 0] / (w / 2.0) - 1.0
    y = img_poly[..., 1] / (h / 2.0) - 1.0
    ix = ((x + 1.0) * w - 1.0) / 2.0
    iy = ((y + 1.0) * h - 1.0) / 2.0

    x0 = jnp.floor(ix).astype(jnp.int32)
    y0 = jnp.floor(iy).astype(jnp.int32)
    x1 = x0 + 1
    y1 = y0 + 1
    wx1 = ix - x0.astype(jnp.float32)
    wx0 = 1.0 - wx1
    wy1 = iy - y0.astype(jnp.float32)
    wy0 = 1.0 - wy1

    feat = cnn_feature[ind]                       # [N, C, H, W]
    n_idx = jnp.arange(img_poly.shape[0])[:, None]

    def gather(fy, fx):
        valid = ((fx >= 0) & (fx < w) & (fy >= 0) & (fy < h)).astype(jnp.float32)
        fxc = jnp.clip(fx, 0, w - 1)
        fyc = jnp.clip(fy, 0, h - 1)
        vals = feat[n_idx, :, fyc, fxc]           # [N, P, C]
        return vals * valid[..., None]

    out = (gather(y0, x0) * (wy0 * wx0)[..., None]
           + gather(y0, x1) * (wy0 * wx1)[..., None]
           + gather(y1, x0) * (wy1 * wx0)[..., None]
           + gather(y1, x1) * (wy1 * wx1)[..., None])   # [N, P, C]
    return out


def evolve_contour(gcn_packed, cnn_feature, i_it_contour, c_it_contour, ind, ro):
    """Mirrors ResGCN.evolve_contour."""
    h, w = cnn_feature.shape[2], cnn_feature.shape[3]
    init_feature = get_gcn_feature(cnn_feature, i_it_contour, ind, h, w)   # [N, P, 64]
    c_scaled = c_it_contour.astype(jnp.float32) * ro                       # [N, P, 2]
    x = jnp.concatenate([init_feature, c_scaled], axis=-1)                 # [N, P, 66]
    w_slab, b_slab = gcn_packed
    offsets = gcn_forward(x, w_slab, b_slab)                               # [N, P, 2]
    return i_it_contour * ro + offsets


# ----------------------------------------------------------------------------
# Parameter initialisation (normal(0, 0.01) weights, zero biases — like __init__)
# ----------------------------------------------------------------------------
def init_gcn_params(key, feature_dim, state_dim):
    k0, k1, k2, k3 = jax.random.split(key, 4)
    std = 0.01
    return {
        "wh": (jax.random.normal(k0, (feature_dim, state_dim)) * std).astype(jnp.float32),
        "bh": jnp.zeros((1, state_dim), jnp.float32),
        "w1": (jax.random.normal(k1, (state_dim, state_dim)) * std).astype(jnp.float32),
        "b1": jnp.zeros((1, state_dim), jnp.float32),
        "w2": (jax.random.normal(k2, (state_dim, state_dim)) * std).astype(jnp.float32),
        "b2": jnp.zeros((1, state_dim), jnp.float32),
        "wp": (jax.random.normal(k3, (state_dim, 2)) * std).astype(jnp.float32),
        "bp": jnp.zeros((1, 2), jnp.float32),
    }


# ----------------------------------------------------------------------------
# ResGCN forward (training-branch core: init contours -> 1 + iter evolutions)
# ----------------------------------------------------------------------------
def resgcn_forward(cnn_feature, i_it_py, c_it_py, py_ind, params_evolve, params_iter, ro):
    packed_evolve = pack_gcn_params(params_evolve)
    packed_iter = [pack_gcn_params(p) for p in params_iter]

    pred = evolve_contour(packed_evolve, cnn_feature, i_it_py, c_it_py, py_ind, ro)
    preds = [pred]
    for i in range(len(packed_iter)):          # self.iter == 2
        pred = pred / ro
        c_pred = img_poly_to_can_poly(pred)
        pred = evolve_contour(packed_iter[i], cnn_feature, pred, c_pred, py_ind, ro)
        preds.append(pred)
    return preds


if __name__ == "__main__":
    # TODO(synk): gcn_utils.init_cirpoint / test_cirpoint (detection-head decoding) are
    # framework glue with no tensor spec here; initial circular contours are synthesized
    # deterministically instead.
    key = jax.random.PRNGKey(0)
    k_feat, k_params = jax.random.split(key, 2)

    points = 32            # opt.gcn_points
    ro = 4                 # self.ro
    n_iter = 2             # self.iter
    B, C, H, W = 2, 64, 16, 16     # cnn_feature NCHW, C=64 (feature_dim = 64 + 2)
    N_poly = 4

    cnn_feature = jax.random.normal(k_feat, (B, C, H, W)).astype(jnp.float32)
    py_ind = jnp.array([0, 0, 1, 1], jnp.int32)

    # initial circular contours in feature-map coordinates
    theta = jnp.linspace(0.0, 2.0 * jnp.pi, points, endpoint=False)
    ring = jnp.stack([jnp.cos(theta), jnp.sin(theta)], axis=-1)          # [P, 2]
    centers = jnp.array([[8.0, 8.0], [6.0, 9.0], [9.0, 6.0], [7.0, 7.0]], jnp.float32)
    radii = jnp.array([5.0, 4.0, 3.5, 4.5], jnp.float32)
    i_it_py = centers[:, None, :] + radii[:, None, None] * ring[None]    # [N, P, 2]
    c_it_py = img_poly_to_can_poly(i_it_py)

    # one "evolve_gcn" + iter extra GCNs (state_dim = points, feature_dim = 64 + 2)
    keys = jax.random.split(k_params, 1 + n_iter)
    params_evolve = init_gcn_params(keys[0], C + 2, points)
    params_iter = [init_gcn_params(keys[1 + i], C + 2, points) for i in range(n_iter)]

    fwd = jax.jit(resgcn_forward, static_argnums=(6,))
    preds = fwd(cnn_feature, i_it_py, c_it_py, py_ind, params_evolve, params_iter, ro)
    preds = jax.block_until_ready(preds)

    assert len(preds) == 1 + n_iter
    for p in preds:
        assert p.shape == (N_poly, points, 2) and p.dtype == jnp.float32
        assert bool(jnp.all(jnp.isfinite(p)))
    print("KERNEL_OK")
</pallas_src>

<mosaic_0001>
module attributes {stable_mosaic.version = 11 : i64} {
  func.func @_gcn_kernel(%arg0: i32, %arg1: memref<4x32x128xf32, #tpu.memory_space<vmem>>, %arg2: memref<4x128x128xbf16, #tpu.memory_space<vmem>>, %arg3: memref<4x1x128xf32, #tpu.memory_space<vmem>>, %arg4: memref<4x32x128xf32, #tpu.memory_space<vmem>>) attributes {dimension_semantics = [#tpu.dimension_semantics<parallel>], iteration_bounds = array<i64: 1>, scalar_prefetch = 0 : i64, scratch_operands = 0 : i64, tpu.core_type = #tpu.core_type<tc>, window_params = [{transform_indices = @transform_0, window_bounds = array<i64: 4, 32, 128>}, {pipeline_mode = #tpu.pipeline_mode<synchronous>, transform_indices = @transform_1, window_bounds = array<i64: 4, 128, 128>}, {pipeline_mode = #tpu.pipeline_mode<synchronous>, transform_indices = @transform_2, window_bounds = array<i64: 4, 1, 128>}, {transform_indices = @transform_3, window_bounds = array<i64: 4, 32, 128>}]} {
    %c0 = arith.constant 0 : index
    %c0_0 = arith.constant 0 : index
    %c0_1 = arith.constant 0 : index
    %0 = vector.load %arg1[%c0, %c0_0, %c0_1] : memref<4x32x128xf32, #tpu.memory_space<vmem>>, vector<4x32x128xf32>
    %1 = vector.shape_cast %0 : vector<4x32x128xf32> to vector<128x128xf32>
    %2 = vector.shape_cast %1 : vector<128x128xf32> to vector<4x32x128xf32>
    %c1_i32 = arith.constant 1 : i32
    %3 = tpu.dynamic_rotate %2 by %c1_i32 dim 1 : vector<4x32x128xf32>, i32 -> vector<4x32x128xf32>
    %4 = arith.addf %2, %3 : vector<4x32x128xf32>
    %c31_i32 = arith.constant 31 : i32
    %5 = tpu.dynamic_rotate %2 by %c31_i32 dim 1 : vector<4x32x128xf32>, i32 -> vector<4x32x128xf32>
    %6 = arith.addf %4, %5 : vector<4x32x128xf32>
    %cst = arith.constant 0.333333343 : f32
    %7 = vector.broadcast %cst : f32 to vector<4x32x128xf32>
    %8 = arith.mulf %6, %7 : vector<4x32x128xf32>
    %9 = vector.shape_cast %8 : vector<4x32x128xf32> to vector<128x128xf32>
    %10 = arith.truncf %9 : vector<128x128xf32> to vector<128x128xbf16>
    %c0_2 = arith.constant 0 : index
    %c0_3 = arith.constant 0 : index
    %c0_4 = arith.constant 0 : index
    %11 = vector.load %arg2[%c0_2, %c0_3, %c0_4] : memref<4x128x128xbf16, #tpu.memory_space<vmem>>, vector<1x128x128xbf16>
    %12 = vector.shape_cast %11 : vector<1x128x128xbf16> to vector<128x128xbf16>
    %cst_5 = arith.constant dense<0.000000e+00> : vector<128x128xf32>
    %13 = tpu.matmul %10, %12, %cst_5 {dimension_numbers = #tpu.dot_dimension_numbers<[1], [0], [0], [1], [0, 0, 1, 1], [], []>} : vector<128x128xbf16>, vector<128x128xbf16>, vector<128x128xf32> -> vector<128x128xf32>
    %c0_6 = arith.constant 0 : index
    %c0_7 = arith.constant 0 : index
    %c0_8 = arith.constant 0 : index
    %14 = vector.load %arg3[%c0_6, %c0_7, %c0_8] : memref<4x1x128xf32, #tpu.memory_space<vmem>>, vector<1x1x128xf32>
    %15 = vector.shape_cast %14 : vector<1x1x128xf32> to vector<1x128xf32>
    %16 = vector.broadcast %15 : vector<1x128xf32> to vector<128x128xf32>
    %17 = arith.addf %13, %16 : vector<128x128xf32>
    %cst_9 = arith.constant 0.000000e+00 : f32
    %18 = vector.broadcast %cst_9 : f32 to vector<128x128xf32>
    %19 = arith.maximumf %17, %18 : vector<128x128xf32>
    %20 = vector.shape_cast %19 : vector<128x128xf32> to vector<4x32x128xf32>
    %c1_i32_10 = arith.constant 1 : i32
    %21 = tpu.dynamic_rotate %20 by %c1_i32_10 dim 1 : vector<4x32x128xf32>, i32 -> vector<4x32x128xf32>
    %22 = arith.addf %20, %21 : vector<4x32x128xf32>
    %c31_i32_11 = arith.constant 31 : i32
    %23 = tpu.dynamic_rotate %20 by %c31_i32_11 dim 1 : vector<4x32x128xf32>, i32 -> vector<4x32x128xf32>
    %24 = arith.addf %22, %23 : vector<4x32x128xf32>
    %cst_12 = arith.constant 0.333333343 : f32
    %25 = vector.broadcast %cst_12 : f32 to vector<4x32x128xf32>
    %26 = arith.mulf %24, %25 : vector<4x32x128xf32>
    %27 = vector.shape_cast %26 : vector<4x32x128xf32> to vector<128x128xf32>
    %28 = arith.truncf %27 : vector<128x128xf32> to vector<128x128xbf16>
    %c1 = arith.constant 1 : index
    %c0_13 = arith.constant 0 : index
    %c0_14 = arith.constant 0 : index
    %29 = vector.load %arg2[%c1, %c0_13, %c0_14] : memref<4x128x128xbf16, #tpu.memory_space<vmem>>, vector<1x128x128xbf16>
    %30 = vector.shape_cast %29 : vector<1x128x128xbf16> to vector<128x128xbf16>
    %cst_15 = arith.constant dense<0.000000e+00> : vector<128x128xf32>
    %31 = tpu.matmul %28, %30, %cst_15 {dimension_numbers = #tpu.dot_dimension_numbers<[1], [0], [0], [1], [0, 0, 1, 1], [], []>} : vector<128x128xbf16>, vector<128x128xbf16>, vector<128x128xf32> -> vector<128x128xf32>
    %c1_16 = arith.constant 1 : index
    %c0_17 = arith.constant 0 : index
    %c0_18 = arith.constant 0 : index
    %32 = vector.load %arg3[%c1_16, %c0_17, %c0_18] : memref<4x1x128xf32, #tpu.memory_space<vmem>>, vector<1x1x128xf32>
    %33 = vector.shape_cast %32 : vector<1x1x128xf32> to vector<1x128xf32>
    %34 = vector.broadcast %33 : vector<1x128xf32> to vector<128x128xf32>
    %35 = arith.addf %31, %34 : vector<128x128xf32>
    %cst_19 = arith.constant 0.000000e+00 : f32
    %36 = vector.broadcast %cst_19 : f32 to vector<128x128xf32>
    %37 = arith.maximumf %35, %36 : vector<128x128xf32>
    %38 = arith.addf %19, %37 : vector<128x128xf32>
    %39 = vector.shape_cast %38 : vector<128x128xf32> to vector<4x32x128xf32>
    %c1_i32_20 = arith.constant 1 : i32
    %40 = tpu.dynamic_rotate %39 by %c1_i32_20 dim 1 : vector<4x32x128xf32>, i32 -> vector<4x32x128xf32>
    %41 = arith.addf %39, %40 : vector<4x32x128xf32>
    %c31_i32_21 = arith.constant 31 : i32
    %42 = tpu.dynamic_rotate %39 by %c31_i32_21 dim 1 : vector<4x32x128xf32>, i32 -> vector<4x32x128xf32>
    %43 = arith.addf %41, %42 : vector<4x32x128xf32>
    %cst_22 = arith.constant 0.333333343 : f32
    %44 = vector.broadcast %cst_22 : f32 to vector<4x32x128xf32>
    %45 = arith.mulf %43, %44 : vector<4x32x128xf32>
    %46 = vector.shape_cast %45 : vector<4x32x128xf32> to vector<128x128xf32>
    %47 = arith.truncf %46 : vector<128x128xf32> to vector<128x128xbf16>
    %c2 = arith.constant 2 : index
    %c0_23 = arith.constant 0 : index
    %c0_24 = arith.constant 0 : index
    %48 = vector.load %arg2[%c2, %c0_23, %c0_24] : memref<4x128x128xbf16, #tpu.memory_space<vmem>>, vector<1x128x128xbf16>
    %49 = vector.shape_cast %48 : vector<1x128x128xbf16> to vector<128x128xbf16>
    %cst_25 = arith.constant dense<0.000000e+00> : vector<128x128xf32>
    %50 = tpu.matmul %47, %49, %cst_25 {dimension_numbers = #tpu.dot_dimension_numbers<[1], [0], [0], [1], [0, 0, 1, 1], [], []>} : vector<128x128xbf16>, vector<128x128xbf16>, vector<128x128xf32> -> vector<128x128xf32>
    %c2_26 = arith.constant 2 : index
    %c0_27 = arith.constant 0 : index
    %c0_28 = arith.constant 0 : index
    %51 = vector.load %arg3[%c2_26, %c0_27, %c0_28] : memref<4x1x128xf32, #tpu.memory_space<vmem>>, vector<1x1x128xf32>
    %52 = vector.shape_cast %51 : vector<1x1x128xf32> to vector<1x128xf32>
    %53 = vector.broadcast %52 : vector<1x128xf32> to vector<128x128xf32>
    %54 = arith.addf %50, %53 : vector<128x128xf32>
    %cst_29 = arith.constant 0.000000e+00 : f32
    %55 = vector.broadcast %cst_29 : f32 to vector<128x128xf32>
    %56 = arith.maximumf %54, %55 : vector<128x128xf32>
    %57 = arith.addf %38, %56 : vector<128x128xf32>
    %58 = arith.truncf %57 : vector<128x128xf32> to vector<128x128xbf16>
    %c3 = arith.constant 3 : index
    %c0_30 = arith.constant 0 : index
    %c0_31 = arith.constant 0 : index
    %59 = vector.load %arg2[%c3, %c0_30, %c0_31] : memref<4x128x128xbf16, #tpu.memory_space<vmem>>, vector<1x128x128xbf16>
    %60 = vector.shape_cast %59 : vector<1x128x128xbf16> to vector<128x128xbf16>
    %cst_32 = arith.constant dense<0.000000e+00> : vector<128x128xf32>
    %61 = tpu.matmul %58, %60, %cst_32 {dimension_numbers = #tpu.dot_dimension_numbers<[1], [0], [0], [1], [0, 0, 1, 1], [], []>} : vector<128x128xbf16>, vector<128x128xbf16>, vector<128x128xf32> -> vector<128x128xf32>
    %c3_33 = arith.constant 3 : index
    %c0_34 = arith.constant 0 : index
    %c0_35 = arith.constant 0 : index
    %62 = vector.load %arg3[%c3_33, %c0_34, %c0_35] : memref<4x1x128xf32, #tpu.memory_space<vmem>>, vector<1x1x128xf32>
    %63 = vector.shape_cast %62 : vector<1x1x128xf32> to vector<1x128xf32>
    %64 = vector.broadcast %63 : vector<1x128xf32> to vector<128x128xf32>
    %65 = arith.addf %61, %64 : vector<128x128xf32>
    %66 = vector.shape_cast %65 : vector<128x128xf32> to vector<4x32x128xf32>
    %c0_36 = arith.constant 0 : index
    %c0_37 = arith.constant 0 : index
    %c0_38 = arith.constant 0 : index
    %67 = vector.load %arg4[%c0_36, %c0_37, %c0_38] : memref<4x32x128xf32, #tpu.memory_space<vmem>>, vector<4x32x128xf32>
    tpu.vector_store %arg4[%c0_36, %c0_37, %c0_38], %66 {strides = array<i32>} : memref<4x32x128xf32, #tpu.memory_space<vmem>>, vector<4x32x128xf32>,
    return
  }
  func.func @transform_0(%arg0: i32) -> (i32, i32, i32) {
    %c0_i32 = arith.constant 0 : i32
    %c0_i32_0 = arith.constant 0 : i32
    %c0_i32_1 = arith.constant 0 : i32
    return %arg0, %c0_i32, %c0_i32_0 : i32, i32, i32
  }
  func.func @transform_1(%arg0: i32) -> (i32, i32, i32) {
    %c0_i32 = arith.constant 0 : i32
    %c0_i32_0 = arith.constant 0 : i32
    %c0_i32_1 = arith.constant 0 : i32
    %c0_i32_2 = arith.constant 0 : i32
    return %c0_i32, %c0_i32_0, %c0_i32_1 : i32, i32, i32
  }
  func.func @transform_2(%arg0: i32) -> (i32, i32, i32) {
    %c0_i32 = arith.constant 0 : i32
    %c0_i32_0 = arith.constant 0 : i32
    %c0_i32_1 = arith.constant 0 : i32
    %c0_i32_2 = arith.constant 0 : i32
    return %c0_i32, %c0_i32_0, %c0_i32_1 : i32, i32, i32
  }
  func.func @transform_3(%arg0: i32) -> (i32, i32, i32) {
    %c0_i32 = arith.constant 0 : i32
    %c0_i32_0 = arith.constant 0 : i32
    %c0_i32_1 = arith.constant 0 : i32
    return %arg0, %c0_i32, %c0_i32_0 : i32, i32, i32
  }
}

</mosaic_0001>

<llo_original>
// kernel: resgcn_forward.3
$region0: #{resgcn_forward.3}
  #allocation0 [shape = 'u32[]', space=smem, size = 0x4, offset = 0x4, fixed_abs, tag = 'smem constant byte address 0x4 - core index']
  #allocation1 [shape = 'u32[72,128]{1,0:T(1,128)}', space=vmem, size = 0x9000, scoped, tag = 'internal scratch']
  %s0 = inlined_call_operand.vmem [shape: f32[4,32,128], index: 0, kind: input, shape index: {}]
  %s1 = inlined_call_operand.vmem [shape: bf16[4,128,128], index: 1, kind: input, shape index: {}]
  %s2 = inlined_call_operand.vmem [shape: f32[4,1,128], index: 2, kind: input, shape index: {}]
  %s3 = inlined_call_operand.vmem [shape: f32[4,32,128], index: 3, kind: output, shape index: {}]
  %s4 = sld [smem:[#allocation0]]
  $region22: #{resgcn_forward.3} parent=0
    _
  %s6 = ssub.s32 1, %s4
  %s7 = scalar_select 0, %s6, %s4
  // Predicated region
  $region2: #{resgcn_forward.3} parent=0 // pred_check
    _
  $region3: #{resgcn_forward.3} parent=0 // pred_check_branch
    %9 = sbr.rel (0) target = $region5
  $region4: #{resgcn_forward.3} parent=0 // pred_region
    _
  $region5: #{resgcn_forward.3} parent=0 // pred_fallthru
    _
  // Predicated region
  $region6: #{resgcn_forward.3} parent=0 // pred_check
    _
  $region7: #{resgcn_forward.3} parent=0 // pred_check_branch
    %11 = sbr.rel (0) target = $region9
  $region8: #{resgcn_forward.3} parent=0 // pred_region
    _
  $region9: #{resgcn_forward.3} parent=0 // pred_fallthru
    _
  // Predicated region
  $region10: #{resgcn_forward.3} parent=0 // pred_check
    _
  $region11: #{resgcn_forward.3} parent=0 // pred_check_branch
    %13 = sbr.rel (0) target = $region13
  $region12: #{resgcn_forward.3} parent=0 // pred_region
    _
  $region13: #{resgcn_forward.3} parent=0 // pred_fallthru
    _
  %v14 = vld [vmem:[%s0] sm:$0xff]
  %v15 = vld [vmem:[%s0 + $0x8] sm:$0xff]
  %v16 = vld [vmem:[%s0 + $0x10] sm:$0xff]
  %v17 = vld [vmem:[%s0 + $0x18] sm:$0xff]
  %v18 = vld [vmem:[%s0 + $0x20] sm:$0xff]
  %v19 = vld [vmem:[%s0 + $0x28] sm:$0xff]
  %v20 = vld [vmem:[%s0 + $0x30] sm:$0xff]
  %v21 = vld [vmem:[%s0 + $0x38] sm:$0xff]
  %v22 = vld [vmem:[%s0 + $0x40] sm:$0xff]
  %v23 = vld [vmem:[%s0 + $0x48] sm:$0xff]
  %v24 = vld [vmem:[%s0 + $0x50] sm:$0xff]
  %v25 = vld [vmem:[%s0 + $0x58] sm:$0xff]
  %v26 = vld [vmem:[%s0 + $0x60] sm:$0xff]
  %v27 = vld [vmem:[%s0 + $0x68] sm:$0xff]
  %v28 = vld [vmem:[%s0 + $0x70] sm:$0xff]
  %v29 = vld [vmem:[%s0 + $0x78] sm:$0xff]
  %v30 = vrot.slane %v14, 7
  %v31 = vrot.slane %v18, 7
  %v32 = vrot.slane %v22, 7
  %v33 = vrot.slane %v26, 7
  %v34 = vrot.slane %v15, 7
  %v35 = vrot.slane %v19, 7
  %v36 = vrot.slane %v23, 7
  %v37 = vrot.slane %v27, 7
  %v38 = vrot.slane %v16, 7
  %v39 = vrot.slane %v20, 7
  %v40 = vrot.slane %v24, 7
  %v41 = vrot.slane %v28, 7
  %v42 = vrot.slane %v17, 7
  %v43 = vrot.slane %v21, 7
  %v44 = vrot.slane %v25, 7
  %v45 = vrot.slane %v29, 7
  %v46 = vlaneseq
  %v47 = vshrl.u32 %v46, 7
  %vm48 = vcmp.lt.s32.totalorder %v47, 1
  %v49 = vsel %vm48, %v38, %v42
  %v50 = vsel %vm48, %v39, %v43
  %v51 = vsel %vm48, %v40, %v44
  %v52 = vsel %vm48, %v41, %v45
  %v53 = vsel %vm48, %v34, %v38
  %v54 = vsel %vm48, %v35, %v39
  %v55 = vsel %vm48, %v36, %v40
  %v56 = vsel %vm48, %v37, %v41
  %v57 = vsel %vm48, %v30, %v34
  %v58 = vsel %vm48, %v31, %v35
  %v59 = vsel %vm48, %v32, %v36
  %v60 = vsel %vm48, %v33, %v37
  %v61 = vsel %vm48, %v42, %v30
  %v62 = vsel %vm48, %v43, %v31
  %v63 = vsel %vm48, %v44, %v32
  %v64 = vsel %vm48, %v45, %v33
  %v65 = vadd.f32 %v14, %v61
  %v66 = vadd.f32 %v15, %v57
  %v67 = vadd.f32 %v16, %v53
  %v68 = vadd.f32 %v17, %v49
  %v69 = vadd.f32 %v18, %v62
  %v70 = vadd.f32 %v19, %v58
  %v71 = vadd.f32 %v20, %v54
  %v72 = vadd.f32 %v21, %v50
  %v73 = vadd.f32 %v22, %v63
  %v74 = vadd.f32 %v23, %v59
  %v75 = vadd.f32 %v24, %v55
  %v76 = vadd.f32 %v25, %v51
  %v77 = vadd.f32 %v26, %v64
  %v78 = vadd.f32 %v27, %v60
  %v79 = vadd.f32 %v28, %v56
  %v80 = vadd.f32 %v29, %v52
  %v81 = vrot.slane %v14, 1
  %v82 = vrot.slane %v18, 1
  %v83 = vrot.slane %v22, 1
  %v84 = vrot.slane %v26, 1
  %v85 = vrot.slane %v15, 1
  %v86 = vrot.slane %v19, 1
  %v87 = vrot.slane %v23, 1
  %v88 = vrot.slane %v27, 1
  %v89 = vrot.slane %v16, 1
  %v90 = vrot.slane %v20, 1
  %v91 = vrot.slane %v24, 1
  %v92 = vrot.slane %v28, 1
  %v93 = vrot.slane %v17, 1
  %v94 = vrot.slane %v21, 1
  %v95 = vrot.slane %v25, 1
  %v96 = vrot.slane %v29, 1
  %vm97 = vcmp.lt.s32.totalorder %v47, 7
  %v98 = vsel %vm97, %v89, %v93
  %v99 = vsel %vm97, %v90, %v94
  %v100 = vsel %vm97, %v91, %v95
  %v101 = vsel %vm97, %v92, %v96
  %v102 = vsel %vm97, %v85, %v89
  %v103 = vsel %vm97, %v86, %v90
  %v104 = vsel %vm97, %v87, %v91
  %v105 = vsel %vm97, %v88, %v92
  %v106 = vsel %vm97, %v81, %v85
  %v107 = vsel %vm97, %v82, %v86
  %v108 = vsel %vm97, %v83, %v87
  %v109 = vsel %vm97, %v84, %v88
  %v110 = vsel %vm97, %v93, %v81
  %v111 = vsel %vm97, %v94, %v82
  %v112 = vsel %vm97, %v95, %v83
  %v113 = vsel %vm97, %v96, %v84
  %v114 = vadd.f32 %v65, %v106
  %v115 = vadd.f32 %v66, %v102
  %v116 = vadd.f32 %v67, %v98
  %v117 = vadd.f32 %v68, %v110
  %v118 = vadd.f32 %v69, %v107
  %v119 = vadd.f32 %v70, %v103
  %v120 = vadd.f32 %v71, %v99
  %v121 = vadd.f32 %v72, %v111
  %v122 = vadd.f32 %v73, %v108
  %v123 = vadd.f32 %v74, %v104
  %v124 = vadd.f32 %v75, %v100
  %v125 = vadd.f32 %v76, %v112
  %v126 = vadd.f32 %v77, %v109
  %v127 = vadd.f32 %v78, %v105
  %v128 = vadd.f32 %v79, %v101
  %v129 = vadd.f32 %v80, %v113
  %v130 = vmul.f32 %v114, 0.33333334
  %v131 = vmul.f32 %v115, 0.33333334
  %v132 = vmul.f32 %v116, 0.33333334
  %v133 = vmul.f32 %v117, 0.33333334
  %v134 = vmul.f32 %v118, 0.33333334
  %v135 = vmul.f32 %v119, 0.33333334
  %v136 = vmul.f32 %v120, 0.33333334
  %v137 = vmul.f32 %v121, 0.33333334
  %v138 = vmul.f32 %v122, 0.33333334
  %v139 = vmul.f32 %v123, 0.33333334
  %v140 = vmul.f32 %v124, 0.33333334
  %v141 = vmul.f32 %v125, 0.33333334
  %v142 = vmul.f32 %v126, 0.33333334
  %v143 = vmul.f32 %v127, 0.33333334
  %v144 = vmul.f32 %v128, 0.33333334
  %v145 = vmul.f32 %v129, 0.33333334
  %v146 = vpack.c.bf16 %v131, %v130
  %v147 = vpack.c.bf16 %v133, %v132
  %v148 = vpack.c.bf16 %v135, %v134
  %v149 = vpack.c.bf16 %v137, %v136
  %v150 = vpack.c.bf16 %v139, %v138
  %v151 = vpack.c.bf16 %v141, %v140
  %v152 = vpack.c.bf16 %v143, %v142
  %v153 = vpack.c.bf16 %v145, %v144
  %v154 = vld [vmem:[%s1] sm:$0xf]
  %v155 = vld [vmem:[%s1 + $0x4] sm:$0xf]
  %v156 = vld [vmem:[%s1 + $0x8] sm:$0xf]
  %v157 = vld [vmem:[%s1 + $0xc] sm:$0xf]
  %v158 = vld [vmem:[%s1 + $0x10] sm:$0xf]
  %v159 = vld [vmem:[%s1 + $0x14] sm:$0xf]
  %v160 = vld [vmem:[%s1 + $0x18] sm:$0xf]
  %v161 = vld [vmem:[%s1 + $0x1c] sm:$0xf]
  %v162 = vld [vmem:[%s1 + $0x20] sm:$0xf]
  %v163 = vld [vmem:[%s1 + $0x24] sm:$0xf]
  %v164 = vld [vmem:[%s1 + $0x28] sm:$0xf]
  %v165 = vld [vmem:[%s1 + $0x2c] sm:$0xf]
  %v166 = vld [vmem:[%s1 + $0x30] sm:$0xf]
  %v167 = vld [vmem:[%s1 + $0x34] sm:$0xf]
  %v168 = vld [vmem:[%s1 + $0x38] sm:$0xf]
  %v169 = vld [vmem:[%s1 + $0x3c] sm:$0xf]
  %v170 = vld [vmem:[%s2] sm:$0x1]
  %v172 = vperm.slane %v170, 0
  %v190 = vunpack.c.l.b16 %v154
  %v191 = vunpack.c.l.b16 %v155
  %v192 = vunpack.c.l.b16 %v156
  %v193 = vunpack.c.l.b16 %v157
  %v194 = vunpack.c.l.b16 %v158
  %v195 = vunpack.c.l.b16 %v159
  %v196 = vunpack.c.l.b16 %v160
  %v197 = vunpack.c.l.b16 %v161
  %v198 = vunpack.c.l.b16 %v162
  %v199 = vunpack.c.l.b16 %v163
  %v200 = vunpack.c.l.b16 %v164
  %v201 = vunpack.c.l.b16 %v165
  %v202 = vunpack.c.l.b16 %v166
  %v203 = vunpack.c.l.b16 %v167
  %v204 = vunpack.c.l.b16 %v168
  %v205 = vunpack.c.l.b16 %v169
  %v206 = vpack.c.b16 %v191, %v190
  %v207 = vpack.c.b16 %v193, %v192
  %v208 = vpack.c.b16 %v195, %v194
  %v209 = vpack.c.b16 %v197, %v196
  %v210 = vpack.c.b16 %v199, %v198
  %v211 = vpack.c.b16 %v201, %v200
  %v212 = vpack.c.b16 %v203, %v202
  %v213 = vpack.c.b16 %v205, %v204
  %222 = vmatpush.bf16.msra.mxu0 %v213
  %223 = vmatpush.bf16.msra.mxu0 %v212
  %224 = vmatpush.bf16.msra.mxu0 %v211
  %225 = vmatpush.bf16.msra.mxu0 %v210
  %226 = vmatpush.bf16.msra.mxu0 %v209
  %227 = vmatpush.bf16.msra.mxu0 %v208
  %228 = vmatpush.bf16.msra.mxu0 %v207
  %229 = vmatpush.bf16.msra.mxu0 %v206
  %230 = vmatmul.bf16.gmra.mxu0 %v146
  %v231 = vpop.f32.mrf.mxu0
  %v232 = vadd.f32 %v172, %v231
  %v233 = vpop.f32.mrf.mxu0
  %v234 = vadd.f32 %v172, %v233
  %235 = vmatmul.bf16.gmra.mxu0 %v147
  %v236 = vpop.f32.mrf.mxu0
  %v237 = vadd.f32 %v172, %v236
  %v238 = vpop.f32.mrf.mxu0
  %v239 = vadd.f32 %v172, %v238
  %240 = vmatmul.bf16.gmra.mxu0 %v148
  %v241 = vpop.f32.mrf.mxu0
  %v242 = vadd.f32 %v172, %v241
  %v243 = vpop.f32.mrf.mxu0
  %v244 = vadd.f32 %v172, %v243
  %245 = vmatmul.bf16.gmra.mxu0 %v149
  %v246 = vpop.f32.mrf.mxu0
  %v247 = vadd.f32 %v172, %v246
  %v248 = vpop.f32.mrf.mxu0
  %v249 = vadd.f32 %v172, %v248
  %250 = vmatmul.bf16.gmra.mxu0 %v150
  %v251 = vpop.f32.mrf.mxu0
  %v252 = vadd.f32 %v172, %v251
  %v253 = vpop.f32.mrf.mxu0
  %v254 = vadd.f32 %v172, %v253
  %255 = vmatmul.bf16.gmra.mxu0 %v151
  %v256 = vpop.f32.mrf.mxu0
  %v257 = vadd.f32 %v172, %v256
  %v258 = vpop.f32.mrf.mxu0
  %v259 = vadd.f32 %v172, %v258
  %260 = vmatmul.bf16.gmra.mxu0 %v152
  %v261 = vpop.f32.mrf.mxu0
  %v262 = vadd.f32 %v172, %v261
  %v263 = vpop.f32.mrf.mxu0
  %v264 = vadd.f32 %v172, %v263
  %265 = vmatmul.bf16.gmra.mxu0 %v153
  %v266 = vpop.f32.mrf.mxu0
  %v267 = vadd.f32 %v172, %v266
  %v268 = vpop.f32.mrf.mxu0
  %v269 = vadd.f32 %v172, %v268
  %270 = vdwg.mxu0
  %v271 = vmax.f32 %v232, 0.0
  %v272 = vmax.f32 %v234, 0.0
  %v273 = vmax.f32 %v237, 0.0
  %v274 = vmax.f32 %v239, 0.0
  %v275 = vmax.f32 %v242, 0.0
  %v276 = vmax.f32 %v244, 0.0
  %v277 = vmax.f32 %v247, 0.0
  %v278 = vmax.f32 %v249, 0.0
  %v279 = vmax.f32 %v252, 0.0
  %v280 = vmax.f32 %v254, 0.0
  %v281 = vmax.f32 %v257, 0.0
  %v282 = vmax.f32 %v259, 0.0
  %v283 = vmax.f32 %v262, 0.0
  %v284 = vmax.f32 %v264, 0.0
  %v285 = vmax.f32 %v267, 0.0
  %v286 = vmax.f32 %v269, 0.0
  %v287 = vrot.slane %v271, 7
  %v288 = vrot.slane %v275, 7
  %v289 = vrot.slane %v279, 7
  %v290 = vrot.slane %v283, 7
  %v291 = vrot.slane %v272, 7
  %v292 = vrot.slane %v276, 7
  %v293 = vrot.slane %v280, 7
  %v294 = vrot.slane %v284, 7
  %v295 = vrot.slane %v273, 7
  %v296 = vrot.slane %v277, 7
  %v297 = vrot.slane %v281, 7
  %v298 = vrot.slane %v285, 7
  %v299 = vrot.slane %v274, 7
  %v300 = vrot.slane %v278, 7
  %v301 = vrot.slane %v282, 7
  %v302 = vrot.slane %v286, 7
  %v303 = vsel %vm48, %v295, %v299
  %v304 = vsel %vm48, %v296, %v300
  %v305 = vsel %vm48, %v297, %v301
  %v306 = vsel %vm48, %v298, %v302
  %v307 = vsel %vm48, %v291, %v295
  %v308 = vsel %vm48, %v292, %v296
  %v309 = vsel %vm48, %v293, %v297
  %v310 = vsel %vm48, %v294, %v298
  %v311 = vsel %vm48, %v287, %v291
  %v312 = vsel %vm48, %v288, %v292
  %v313 = vsel %vm48, %v289, %v293
  %v314 = vsel %vm48, %v290, %v294
  %v315 = vsel %vm48, %v299, %v287
  %v316 = vsel %vm48, %v300, %v288
  %v317 = vsel %vm48, %v301, %v289
  %v318 = vsel %vm48, %v302, %v290
  %v319 = vadd.f32 %v271, %v315
  %v320 = vadd.f32 %v272, %v311
  %v321 = vadd.f32 %v273, %v307
  %v322 = vadd.f32 %v274, %v303
  %v323 = vadd.f32 %v275, %v316
  %v324 = vadd.f32 %v276, %v312
  %v325 = vadd.f32 %v277, %v308
  %v326 = vadd.f32 %v278, %v304
  %v327 = vadd.f32 %v279, %v317
  %v328 = vadd.f32 %v280, %v313
  %v329 = vadd.f32 %v281, %v309
  %v330 = vadd.f32 %v282, %v305
  %v331 = vadd.f32 %v283, %v318
  %v332 = vadd.f32 %v284, %v314
  %v333 = vadd.f32 %v285, %v310
  %v334 = vadd.f32 %v286, %v306
  %v335 = vrot.slane %v271, 1
  %v336 = vrot.slane %v275, 1
  %v337 = vrot.slane %v279, 1
  %v338 = vrot.slane %v283, 1
  %v339 = vrot.slane %v272, 1
  %v340 = vrot.slane %v276, 1
  %v341 = vrot.slane %v280, 1
  %v342 = vrot.slane %v284, 1
  %v343 = vrot.slane %v273, 1
  %v344 = vrot.slane %v277, 1
  %v345 = vrot.slane %v281, 1
  %v346 = vrot.slane %v285, 1
  %v347 = vrot.slane %v274, 1
  %v348 = vrot.slane %v278, 1
  %v349 = vrot.slane %v282, 1
  %v350 = vrot.slane %v286, 1
  %v351 = vsel %vm97, %v343, %v347
  %v352 = vsel %vm97, %v344, %v348
  %v353 = vsel %vm97, %v345, %v349
  %v354 = vsel %vm97, %v346, %v350
  %v355 = vsel %vm97, %v339, %v343
  %v356 = vsel %vm97, %v340, %v344
  %v357 = vsel %vm97, %v341, %v345
  %v358 = vsel %vm97, %v342, %v346
  %v359 = vsel %vm97, %v335, %v339
  %v360 = vsel %vm97, %v336, %v340
  %v361 = vsel %vm97, %v337, %v341
  %v362 = vsel %vm97, %v338, %v342
  %v363 = vsel %vm97, %v347, %v335
  %v364 = vsel %vm97, %v348, %v336
  %v365 = vsel %vm97, %v349, %v337
  %v366 = vsel %vm97, %v350, %v338
  %v367 = vadd.f32 %v319, %v359
  %v368 = vadd.f32 %v320, %v355
  %v369 = vadd.f32 %v321, %v351
  %v370 = vadd.f32 %v322, %v363
  %v371 = vadd.f32 %v323, %v360
  %v372 = vadd.f32 %v324, %v356
  %v373 = vadd.f32 %v325, %v352
  %v374 = vadd.f32 %v326, %v364
  %v375 = vadd.f32 %v327, %v361
  %v376 = vadd.f32 %v328, %v357
  %v377 = vadd.f32 %v329, %v353
  %v378 = vadd.f32 %v330, %v365
  %v379 = vadd.f32 %v331, %v362
  %v380 = vadd.f32 %v332, %v358
  %v381 = vadd.f32 %v333, %v354
  %v382 = vadd.f32 %v334, %v366
  %v383 = vmul.f32 %v367, 0.33333334
  %v384 = vmul.f32 %v368, 0.33333334
  %v385 = vmul.f32 %v369, 0.33333334
  %v386 = vmul.f32 %v370, 0.33333334
  %v387 = vmul.f32 %v371, 0.33333334
  %v388 = vmul.f32 %v372, 0.33333334
  %v389 = vmul.f32 %v373, 0.33333334
  %v390 = vmul.f32 %v374, 0.33333334
  %v391 = vmul.f32 %v375, 0.33333334
  %v392 = vmul.f32 %v376, 0.33333334
  %v393 = vmul.f32 %v377, 0.33333334
  %v394 = vmul.f32 %v378, 0.33333334
  %v395 = vmul.f32 %v379, 0.33333334
  %v396 = vmul.f32 %v380, 0.33333334
  %v397 = vmul.f32 %v381, 0.33333334
  %v398 = vmul.f32 %v382, 0.33333334
  %v399 = vpack.c.bf16 %v384, %v383
  %v400 = vpack.c.bf16 %v386, %v385
  %v401 = vpack.c.bf16 %v388, %v387
  %v402 = vpack.c.bf16 %v390, %v389
  %v403 = vpack.c.bf16 %v392, %v391
  %v404 = vpack.c.bf16 %v394, %v393
  %v405 = vpack.c.bf16 %v396, %v395
  %v406 = vpack.c.bf16 %v398, %v397
  %s407 = scalar_lea.vmem %s1, 64
  %v408 = vld [vmem:[%s407] sm:$0xf]
  %v409 = vld [vmem:[%s407 + $0x4] sm:$0xf]
  %v410 = vld [vmem:[%s407 + $0x8] sm:$0xf]
  %v411 = vld [vmem:[%s407 + $0xc] sm:$0xf]
  %v412 = vld [vmem:[%s407 + $0x10] sm:$0xf]
  %v413 = vld [vmem:[%s407 + $0x14] sm:$0xf]
  %v414 = vld [vmem:[%s407 + $0x18] sm:$0xf]
  %v415 = vld [vmem:[%s407 + $0x1c] sm:$0xf]
  %v416 = vld [vmem:[%s407 + $0x20] sm:$0xf]
  %v417 = vld [vmem:[%s407 + $0x24] sm:$0xf]
  %v418 = vld [vmem:[%s407 + $0x28] sm:$0xf]
  %v419 = vld [vmem:[%s407 + $0x2c] sm:$0xf]
  %v420 = vld [vmem:[%s407 + $0x30] sm:$0xf]
  %v421 = vld [vmem:[%s407 + $0x34] sm:$0xf]
  %v422 = vld [vmem:[%s407 + $0x38] sm:$0xf]
  %v423 = vld [vmem:[%s407 + $0x3c] sm:$0xf]
  %s424 = scalar_lea.vmem %s2, 1
  %v425 = vld [vmem:[%s424] sm:$0x1]
  %v427 = vperm.slane %v425, 0
  %v445 = vunpack.c.l.b16 %v408
  %v446 = vunpack.c.l.b16 %v409
  %v447 = vunpack.c.l.b16 %v410
  %v448 = vunpack.c.l.b16 %v411
  %v449 = vunpack.c.l.b16 %v412
  %v450 = vunpack.c.l.b16 %v413
  %v451 = vunpack.c.l.b16 %v414
  %v452 = vunpack.c.l.b16 %v415
  %v453 = vunpack.c.l.b16 %v416
  %v454 = vunpack.c.l.b16 %v417
  %v455 = vunpack.c.l.b16 %v418
  %v456 = vunpack.c.l.b16 %v419
  %v457 = vunpack.c.l.b16 %v420
  %v458 = vunpack.c.l.b16 %v421
  %v459 = vunpack.c.l.b16 %v422
  %v460 = vunpack.c.l.b16 %v423
  %v461 = vpack.c.b16 %v446, %v445
  %v462 = vpack.c.b16 %v448, %v447
  %v463 = vpack.c.b16 %v450, %v449
  %v464 = vpack.c.b16 %v452, %v451
  %v465 = vpack.c.b16 %v454, %v453
  %v466 = vpack.c.b16 %v456, %v455
  %v467 = vpack.c.b16 %v458, %v457
  %v468 = vpack.c.b16 %v460, %v459
  %477 = vmatpush.bf16.msra.mxu0 %v468
  %478 = vmatpush.bf16.msra.mxu0 %v467
  %479 = vmatpush.bf16.msra.mxu0 %v466
  %480 = vmatpush.bf16.msra.mxu0 %v465
  %481 = vmatpush.bf16.msra.mxu0 %v464
  %482 = vmatpush.bf16.msra.mxu0 %v463
  %483 = vmatpush.bf16.msra.mxu0 %v462
  %484 = vmatpush.bf16.msra.mxu0 %v461
  %485 = vmatmul.bf16.gmra.mxu0 %v399
  %v486 = vpop.f32.mrf.mxu0
  %v487 = vadd.f32 %v427, %v486
  %v488 = vpop.f32.mrf.mxu0
  %v489 = vadd.f32 %v427, %v488
  %490 = vmatmul.bf16.gmra.mxu0 %v400
  %v491 = vpop.f32.mrf.mxu0
  %v492 = vadd.f32 %v427, %v491
  %v493 = vpop.f32.mrf.mxu0
  %v494 = vadd.f32 %v427, %v493
  %495 = vmatmul.bf16.gmra.mxu0 %v401
  %v496 = vpop.f32.mrf.mxu0
  %v497 = vadd.f32 %v427, %v496
  %v498 = vpop.f32.mrf.mxu0
  %v499 = vadd.f32 %v427, %v498
  %500 = vmatmul.bf16.gmra.mxu0 %v402
  %v501 = vpop.f32.mrf.mxu0
  %v502 = vadd.f32 %v427, %v501
  %v503 = vpop.f32.mrf.mxu0
  %v504 = vadd.f32 %v427, %v503
  %505 = vmatmul.bf16.gmra.mxu0 %v403
  %v506 = vpop.f32.mrf.mxu0
  %v507 = vadd.f32 %v427, %v506
  %v508 = vpop.f32.mrf.mxu0
  %v509 = vadd.f32 %v427, %v508
  %510 = vmatmul.bf16.gmra.mxu0 %v404
  %v511 = vpop.f32.mrf.mxu0
  %v512 = vadd.f32 %v427, %v511
  %v513 = vpop.f32.mrf.mxu0
  %v514 = vadd.f32 %v427, %v513
  %515 = vmatmul.bf16.gmra.mxu0 %v405
  %v516 = vpop.f32.mrf.mxu0
  %v517 = vadd.f32 %v427, %v516
  %v518 = vpop.f32.mrf.mxu0
  %v519 = vadd.f32 %v427, %v518
  %520 = vmatmul.bf16.gmra.mxu0 %v406
  %v521 = vpop.f32.mrf.mxu0
  %v522 = vadd.f32 %v427, %v521
  %v523 = vpop.f32.mrf.mxu0
  %v524 = vadd.f32 %v427, %v523
  %525 = vdwg.mxu0
  %v526 = vmax.f32 %v487, 0.0
  %v527 = vmax.f32 %v489, 0.0
  %v528 = vmax.f32 %v492, 0.0
  %v529 = vmax.f32 %v494, 0.0
  %v530 = vmax.f32 %v497, 0.0
  %v531 = vmax.f32 %v499, 0.0
  %v532 = vmax.f32 %v502, 0.0
  %v533 = vmax.f32 %v504, 0.0
  %v534 = vmax.f32 %v507, 0.0
  %v535 = vmax.f32 %v509, 0.0
  %v536 = vmax.f32 %v512, 0.0
  %v537 = vmax.f32 %v514, 0.0
  %v538 = vmax.f32 %v517, 0.0
  %v539 = vmax.f32 %v519, 0.0
  %v540 = vmax.f32 %v522, 0.0
  %v541 = vmax.f32 %v524, 0.0
  %v542 = vadd.f32 %v271, %v526
  %v543 = vadd.f32 %v272, %v527
  %v544 = vadd.f32 %v273, %v528
  %v545 = vadd.f32 %v274, %v529
  %v546 = vadd.f32 %v275, %v530
  %v547 = vadd.f32 %v276, %v531
  %v548 = vadd.f32 %v277, %v532
  %v549 = vadd.f32 %v278, %v533
  %v550 = vadd.f32 %v279, %v534
  %v551 = vadd.f32 %v280, %v535
  %v552 = vadd.f32 %v281, %v536
  %v553 = vadd.f32 %v282, %v537
  %v554 = vadd.f32 %v283, %v538
  %v555 = vadd.f32 %v284, %v539
  %v556 = vadd.f32 %v285, %v540
  %v557 = vadd.f32 %v286, %v541
  %v558 = vrot.slane %v542, 7
  %v559 = vrot.slane %v546, 7
  %v560 = vrot.slane %v550, 7
  %v561 = vrot.slane %v554, 7
  %v562 = vrot.slane %v543, 7
  %v563 = vrot.slane %v547, 7
  %v564 = vrot.slane %v551, 7
  %v565 = vrot.slane %v555, 7
  %v566 = vrot.slane %v544, 7
  %v567 = vrot.slane %v548, 7
  %v568 = vrot.slane %v552, 7
  %v569 = vrot.slane %v556, 7
  %v570 = vrot.slane %v545, 7
  %v571 = vrot.slane %v549, 7
  %v572 = vrot.slane %v553, 7
  %v573 = vrot.slane %v557, 7
  %v574 = vsel %vm48, %v566, %v570
  %v575 = vsel %vm48, %v567, %v571
  %v576 = vsel %vm48, %v568, %v572
  %v577 = vsel %vm48, %v569, %v573
  %v578 = vsel %vm48, %v562, %v566
  %v579 = vsel %vm48, %v563, %v567
  %v580 = vsel %vm48, %v564, %v568
  %v581 = vsel %vm48, %v565, %v569
  %v582 = vsel %vm48, %v558, %v562
  %v583 = vsel %vm48, %v559, %v563
  %v584 = vsel %vm48, %v560, %v564
  %v585 = vsel %vm48, %v561, %v565
  %v586 = vsel %vm48, %v570, %v558
  %v587 = vsel %vm48, %v571, %v559
  %v588 = vsel %vm48, %v572, %v560
  %v589 = vsel %vm48, %v573, %v561
  %v590 = vadd.f32 %v542, %v586
  %v591 = vadd.f32 %v543, %v582
  %v592 = vadd.f32 %v544, %v578
  %v593 = vadd.f32 %v545, %v574
  %v594 = vadd.f32 %v546, %v587
  %v595 = vadd.f32 %v547, %v583
  %v596 = vadd.f32 %v548, %v579
  %v597 = vadd.f32 %v549, %v575
  %v598 = vadd.f32 %v550, %v588
  %v599 = vadd.f32 %v551, %v584
  %v600 = vadd.f32 %v552, %v580
  %v601 = vadd.f32 %v553, %v576
  %v602 = vadd.f32 %v554, %v589
  %v603 = vadd.f32 %v555, %v585
  %v604 = vadd.f32 %v556, %v581
  %v605 = vadd.f32 %v557, %v577
  %v606 = vrot.slane %v542, 1
  %v607 = vrot.slane %v546, 1
  %v608 = vrot.slane %v550, 1
  %v609 = vrot.slane %v554, 1
  %v610 = vrot.slane %v543, 1
  %v611 = vrot.slane %v547, 1
  %v612 = vrot.slane %v551, 1
  %v613 = vrot.slane %v555, 1
  %v614 = vrot.slane %v544, 1
  %v615 = vrot.slane %v548, 1
  %v616 = vrot.slane %v552, 1
  %v617 = vrot.slane %v556, 1
  %v618 = vrot.slane %v545, 1
  %v619 = vrot.slane %v549, 1
  %v620 = vrot.slane %v553, 1
  %v621 = vrot.slane %v557, 1
  %v622 = vsel %vm97, %v614, %v618
  %v623 = vsel %vm97, %v615, %v619
  %v624 = vsel %vm97, %v616, %v620
  %v625 = vsel %vm97, %v617, %v621
  %v626 = vsel %vm97, %v610, %v614
  %v627 = vsel %vm97, %v611, %v615
  %v628 = vsel %vm97, %v612, %v616
  %v629 = vsel %vm97, %v613, %v617
  %v630 = vsel %vm97, %v606, %v610
  %v631 = vsel %vm97, %v607, %v611
  %v632 = vsel %vm97, %v608, %v612
  %v633 = vsel %vm97, %v609, %v613
  %v634 = vsel %vm97, %v618, %v606
  %v635 = vsel %vm97, %v619, %v607
  %v636 = vsel %vm97, %v620, %v608
  %v637 = vsel %vm97, %v621, %v609
  %v638 = vadd.f32 %v590, %v630
  %v639 = vadd.f32 %v591, %v626
  %v640 = vadd.f32 %v592, %v622
  %v641 = vadd.f32 %v593, %v634
  %v642 = vadd.f32 %v594, %v631
  %v643 = vadd.f32 %v595, %v627
  %v644 = vadd.f32 %v596, %v623
  %v645 = vadd.f32 %v597, %v635
  %v646 = vadd.f32 %v598, %v632
  %v647 = vadd.f32 %v599, %v628
  %v648 = vadd.f32 %v600, %v624
  %v649 = vadd.f32 %v601, %v636
  %v650 = vadd.f32 %v602, %v633
  %v651 = vadd.f32 %v603, %v629
  %v652 = vadd.f32 %v604, %v625
  %v653 = vadd.f32 %v605, %v637
  %v654 = vmul.f32 %v638, 0.33333334
  %v655 = vmul.f32 %v639, 0.33333334
  %v656 = vmul.f32 %v640, 0.33333334
  %v657 = vmul.f32 %v641, 0.33333334
  %v658 = vmul.f32 %v642, 0.33333334
  %v659 = vmul.f32 %v643, 0.33333334
  %v660 = vmul.f32 %v644, 0.33333334
  %v661 = vmul.f32 %v645, 0.33333334
  %v662 = vmul.f32 %v646, 0.33333334
  %v663 = vmul.f32 %v647, 0.33333334
  %v664 = vmul.f32 %v648, 0.33333334
  %v665 = vmul.f32 %v649, 0.33333334
  %v666 = vmul.f32 %v650, 0.33333334
  %v667 = vmul.f32 %v651, 0.33333334
  %v668 = vmul.f32 %v652, 0.33333334
  %v669 = vmul.f32 %v653, 0.33333334
  %v670 = vpack.c.bf16 %v655, %v654
  %v671 = vpack.c.bf16 %v657, %v656
  %v672 = vpack.c.bf16 %v659, %v658
  %v673 = vpack.c.bf16 %v661, %v660
  %v674 = vpack.c.bf16 %v663, %v662
  %v675 = vpack.c.bf16 %v665, %v664
  %v676 = vpack.c.bf16 %v667, %v666
  %v677 = vpack.c.bf16 %v669, %v668
  %s678 = scalar_lea.vmem %s1, 128
  %v679 = vld [vmem:[%s678] sm:$0xf]
  %v680 = vld [vmem:[%s678 + $0x4] sm:$0xf]
  %v681 = vld [vmem:[%s678 + $0x8] sm:$0xf]
  %v682 = vld [vmem:[%s678 + $0xc] sm:$0xf]
  %v683 = vld [vmem:[%s678 + $0x10] sm:$0xf]
  %v684 = vld [vmem:[%s678 + $0x14] sm:$0xf]
  %v685 = vld [vmem:[%s678 + $0x18] sm:$0xf]
  %v686 = vld [vmem:[%s678 + $0x1c] sm:$0xf]
  %v687 = vld [vmem:[%s678 + $0x20] sm:$0xf]
  %v688 = vld [vmem:[%s678 + $0x24] sm:$0xf]
  %v689 = vld [vmem:[%s678 + $0x28] sm:$0xf]
  %v690 = vld [vmem:[%s678 + $0x2c] sm:$0xf]
  %v691 = vld [vmem:[%s678 + $0x30] sm:$0xf]
  %v692 = vld [vmem:[%s678 + $0x34] sm:$0xf]
  %v693 = vld [vmem:[%s678 + $0x38] sm:$0xf]
  %v694 = vld [vmem:[%s678 + $0x3c] sm:$0xf]
  %s695 = scalar_lea.vmem %s2, 2
  %v696 = vld [vmem:[%s695] sm:$0x1]
  %v698 = vperm.slane %v696, 0
  %v716 = vunpack.c.l.b16 %v679
  %v717 = vunpack.c.l.b16 %v680
  %v718 = vunpack.c.l.b16 %v681
  %v719 = vunpack.c.l.b16 %v682
  %v720 = vunpack.c.l.b16 %v683
  %v721 = vunpack.c.l.b16 %v684
  %v722 = vunpack.c.l.b16 %v685
  %v723 = vunpack.c.l.b16 %v686
  %v724 = vunpack.c.l.b16 %v687
  %v725 = vunpack.c.l.b16 %v688
  %v726 = vunpack.c.l.b16 %v689
  %v727 = vunpack.c.l.b16 %v690
  %v728 = vunpack.c.l.b16 %v691
  %v729 = vunpack.c.l.b16 %v692
  %v730 = vunpack.c.l.b16 %v693
  %v731 = vunpack.c.l.b16 %v694
  %v732 = vpack.c.b16 %v717, %v716
  %v733 = vpack.c.b16 %v719, %v718
  %v734 = vpack.c.b16 %v721, %v720
  %v735 = vpack.c.b16 %v723, %v722
  %v736 = vpack.c.b16 %v725, %v724
  %v737 = vpack.c.b16 %v727, %v726
  %v738 = vpack.c.b16 %v729, %v728
  %v739 = vpack.c.b16 %v731, %v730
  %748 = vmatpush.bf16.msra.mxu0 %v739
  %749 = vmatpush.bf16.msra.mxu0 %v738
  %750 = vmatpush.bf16.msra.mxu0 %v737
  %751 = vmatpush.bf16.msra.mxu0 %v736
  %752 = vmatpush.bf16.msra.mxu0 %v735
  %753 = vmatpush.bf16.msra.mxu0 %v734
  %754 = vmatpush.bf16.msra.mxu0 %v733
  %755 = vmatpush.bf16.msra.mxu0 %v732
  %756 = vmatmul.bf16.gmra.mxu0 %v670
  %v757 = vpop.f32.mrf.mxu0
  %v758 = vadd.f32 %v698, %v757
  %v759 = vpop.f32.mrf.mxu0
  %v760 = vadd.f32 %v698, %v759
  %761 = vmatmul.bf16.gmra.mxu0 %v671
  %v762 = vpop.f32.mrf.mxu0
  %v763 = vadd.f32 %v698, %v762
  %v764 = vpop.f32.mrf.mxu0
  %v765 = vadd.f32 %v698, %v764
  %766 = vmatmul.bf16.gmra.mxu0 %v672
  %v767 = vpop.f32.mrf.mxu0
  %v768 = vadd.f32 %v698, %v767
  %v769 = vpop.f32.mrf.mxu0
  %v770 = vadd.f32 %v698, %v769
  %771 = vmatmul.bf16.gmra.mxu0 %v673
  %v772 = vpop.f32.mrf.mxu0
  %v773 = vadd.f32 %v698, %v772
  %v774 = vpop.f32.mrf.mxu0
  %v775 = vadd.f32 %v698, %v774
  %776 = vmatmul.bf16.gmra.mxu0 %v674
  %v777 = vpop.f32.mrf.mxu0
  %v778 = vadd.f32 %v698, %v777
  %v779 = vpop.f32.mrf.mxu0
  %v780 = vadd.f32 %v698, %v779
  %781 = vmatmul.bf16.gmra.mxu0 %v675
  %v782 = vpop.f32.mrf.mxu0
  %v783 = vadd.f32 %v698, %v782
  %v784 = vpop.f32.mrf.mxu0
  %v785 = vadd.f32 %v698, %v784
  %786 = vmatmul.bf16.gmra.mxu0 %v676
  %v787 = vpop.f32.mrf.mxu0
  %v788 = vadd.f32 %v698, %v787
  %v789 = vpop.f32.mrf.mxu0
  %v790 = vadd.f32 %v698, %v789
  %791 = vmatmul.bf16.gmra.mxu0 %v677
  %v792 = vpop.f32.mrf.mxu0
  %v793 = vadd.f32 %v698, %v792
  %v794 = vpop.f32.mrf.mxu0
  %v795 = vadd.f32 %v698, %v794
  %796 = vdwg.mxu0
  %v797 = vmax.f32 %v758, 0.0
  %v798 = vmax.f32 %v760, 0.0
  %v799 = vmax.f32 %v763, 0.0
  %v800 = vmax.f32 %v765, 0.0
  %v801 = vmax.f32 %v768, 0.0
  %v802 = vmax.f32 %v770, 0.0
  %v803 = vmax.f32 %v773, 0.0
  %v804 = vmax.f32 %v775, 0.0
  %v805 = vmax.f32 %v778, 0.0
  %v806 = vmax.f32 %v780, 0.0
  %v807 = vmax.f32 %v783, 0.0
  %v808 = vmax.f32 %v785, 0.0
  %v809 = vmax.f32 %v788, 0.0
  %v810 = vmax.f32 %v790, 0.0
  %v811 = vmax.f32 %v793, 0.0
  %v812 = vmax.f32 %v795, 0.0
  %v813 = vadd.f32 %v542, %v797
  %v814 = vadd.f32 %v543, %v798
  %v815 = vadd.f32 %v544, %v799
  %v816 = vadd.f32 %v545, %v800
  %v817 = vadd.f32 %v546, %v801
  %v818 = vadd.f32 %v547, %v802
  %v819 = vadd.f32 %v548, %v803
  %v820 = vadd.f32 %v549, %v804
  %v821 = vadd.f32 %v550, %v805
  %v822 = vadd.f32 %v551, %v806
  %v823 = vadd.f32 %v552, %v807
  %v824 = vadd.f32 %v553, %v808
  %v825 = vadd.f32 %v554, %v809
  %v826 = vadd.f32 %v555, %v810
  %v827 = vadd.f32 %v556, %v811
  %v828 = vadd.f32 %v557, %v812
  %v829 = vpack.c.bf16 %v814, %v813
  %v830 = vpack.c.bf16 %v816, %v815
  %v831 = vpack.c.bf16 %v818, %v817
  %v832 = vpack.c.bf16 %v820, %v819
  %v833 = vpack.c.bf16 %v822, %v821
  %v834 = vpack.c.bf16 %v824, %v823
  %v835 = vpack.c.bf16 %v826, %v825
  %v836 = vpack.c.bf16 %v828, %v827
  %s837 = scalar_lea.vmem %s1, 192
  %v838 = vld [vmem:[%s837] sm:$0xf]
  %v839 = vld [vmem:[%s837 + $0x4] sm:$0xf]
  %v840 = vld [vmem:[%s837 + $0x8] sm:$0xf]
  %v841 = vld [vmem:[%s837 + $0xc] sm:$0xf]
  %v842 = vld [vmem:[%s837 + $0x10] sm:$0xf]
  %v843 = vld [vmem:[%s837 + $0x14] sm:$0xf]
  %v844 = vld [vmem:[%s837 + $0x18] sm:$0xf]
  %v845 = vld [vmem:[%s837 + $0x1c] sm:$0xf]
  %v846 = vld [vmem:[%s837 + $0x20] sm:$0xf]
  %v847 = vld [vmem:[%s837 + $0x24] sm:$0xf]
  %v848 = vld [vmem:[%s837 + $0x28] sm:$0xf]
  %v849 = vld [vmem:[%s837 + $0x2c] sm:$0xf]
  %v850 = vld [vmem:[%s837 + $0x30] sm:$0xf]
  %v851 = vld [vmem:[%s837 + $0x34] sm:$0xf]
  %v852 = vld [vmem:[%s837 + $0x38] sm:$0xf]
  %v853 = vld [vmem:[%s837 + $0x3c] sm:$0xf]
  %s854 = scalar_lea.vmem %s2, 3
  %v855 = vld [vmem:[%s854] sm:$0x1]
  %v857 = vperm.slane %v855, 0
  %v875 = vunpack.c.l.b16 %v838
  %v876 = vunpack.c.l.b16 %v839
  %v877 = vunpack.c.l.b16 %v840
  %v878 = vunpack.c.l.b16 %v841
  %v879 = vunpack.c.l.b16 %v842
  %v880 = vunpack.c.l.b16 %v843
  %v881 = vunpack.c.l.b16 %v844
  %v882 = vunpack.c.l.b16 %v845
  %v883 = vunpack.c.l.b16 %v846
  %v884 = vunpack.c.l.b16 %v847
  %v885 = vunpack.c.l.b16 %v848
  %v886 = vunpack.c.l.b16 %v849
  %v887 = vunpack.c.l.b16 %v850
  %v888 = vunpack.c.l.b16 %v851
  %v889 = vunpack.c.l.b16 %v852
  %v890 = vunpack.c.l.b16 %v853
  %v891 = vpack.c.b16 %v876, %v875
  %v892 = vpack.c.b16 %v878, %v877
  %v893 = vpack.c.b16 %v880, %v879
  %v894 = vpack.c.b16 %v882, %v881
  %v895 = vpack.c.b16 %v884, %v883
  %v896 = vpack.c.b16 %v886, %v885
  %v897 = vpack.c.b16 %v888, %v887
  %v898 = vpack.c.b16 %v890, %v889
  %907 = vmatpush.bf16.msra.mxu0 %v898
  %908 = vmatpush.bf16.msra.mxu0 %v897
  %909 = vmatpush.bf16.msra.mxu0 %v896
  %910 = vmatpush.bf16.msra.mxu0 %v895
  %911 = vmatpush.bf16.msra.mxu0 %v894
  %912 = vmatpush.bf16.msra.mxu0 %v893
  %913 = vmatpush.bf16.msra.mxu0 %v892
  %914 = vmatpush.bf16.msra.mxu0 %v891
  %915 = vmatmul.bf16.gmra.mxu0 %v829
  %v916 = vpop.f32.mrf.mxu0
  %v917 = vadd.f32 %v857, %v916
  %v918 = vpop.f32.mrf.mxu0
  %v919 = vadd.f32 %v857, %v918
  %920 = vmatmul.bf16.gmra.mxu0 %v830
  %v921 = vpop.f32.mrf.mxu0
  %v922 = vadd.f32 %v857, %v921
  %v923 = vpop.f32.mrf.mxu0
  %v924 = vadd.f32 %v857, %v923
  %925 = vmatmul.bf16.gmra.mxu0 %v831
  %v926 = vpop.f32.mrf.mxu0
  %v927 = vadd.f32 %v857, %v926
  %v928 = vpop.f32.mrf.mxu0
  %v929 = vadd.f32 %v857, %v928
  %930 = vmatmul.bf16.gmra.mxu0 %v832
  %v931 = vpop.f32.mrf.mxu0
  %v932 = vadd.f32 %v857, %v931
  %v933 = vpop.f32.mrf.mxu0
  %v934 = vadd.f32 %v857, %v933
  %935 = vmatmul.bf16.gmra.mxu0 %v833
  %v936 = vpop.f32.mrf.mxu0
  %v937 = vadd.f32 %v857, %v936
  %v938 = vpop.f32.mrf.mxu0
  %v939 = vadd.f32 %v857, %v938
  %940 = vmatmul.bf16.gmra.mxu0 %v834
  %v941 = vpop.f32.mrf.mxu0
  %v942 = vadd.f32 %v857, %v941
  %v943 = vpop.f32.mrf.mxu0
  %v944 = vadd.f32 %v857, %v943
  %945 = vmatmul.bf16.gmra.mxu0 %v835
  %v946 = vpop.f32.mrf.mxu0
  %v947 = vadd.f32 %v857, %v946
  %v948 = vpop.f32.mrf.mxu0
  %v949 = vadd.f32 %v857, %v948
  %950 = vmatmul.bf16.gmra.mxu0 %v836
  %v951 = vpop.f32.mrf.mxu0
  %v952 = vadd.f32 %v857, %v951
  %v953 = vpop.f32.mrf.mxu0
  %v954 = vadd.f32 %v857, %v953
  %955 = vdwg.mxu0
  %956 = vst [vmem:[%s3] sm:$0xff] %v917
  %957 = vst [vmem:[%s3 + $0x8] sm:$0xff] %v919
  %958 = vst [vmem:[%s3 + $0x10] sm:$0xff] %v922
  %959 = vst [vmem:[%s3 + $0x18] sm:$0xff] %v924
  %960 = vst [vmem:[%s3 + $0x20] sm:$0xff] %v927
  %961 = vst [vmem:[%s3 + $0x28] sm:$0xff] %v929
  %962 = vst [vmem:[%s3 + $0x30] sm:$0xff] %v932
  %963 = vst [vmem:[%s3 + $0x38] sm:$0xff] %v934
  %964 = vst [vmem:[%s3 + $0x40] sm:$0xff] %v937
  %965 = vst [vmem:[%s3 + $0x48] sm:$0xff] %v939
  %966 = vst [vmem:[%s3 + $0x50] sm:$0xff] %v942
  %967 = vst [vmem:[%s3 + $0x58] sm:$0xff] %v944
  %968 = vst [vmem:[%s3 + $0x60] sm:$0xff] %v947
  %969 = vst [vmem:[%s3 + $0x68] sm:$0xff] %v949
  %970 = vst [vmem:[%s3 + $0x70] sm:$0xff] %v952
  %971 = vst [vmem:[%s3 + $0x78] sm:$0xff] %v954
  // Predicated region
  $region14: #{resgcn_forward.3} parent=0 // pred_check
    _
  $region15: #{resgcn_forward.3} parent=0 // pred_check_branch
    %973 = sbr.rel (0) target = $region17
  $region16: #{resgcn_forward.3} parent=0 // pred_region
    _
  $region17: #{resgcn_forward.3} parent=0 // pred_fallthru
    _
  // Predicated region
  $region18: #{resgcn_forward.3} parent=0 // pred_check
    _
  $region19: #{resgcn_forward.3} parent=0 // pred_check_branch
    %975 = sbr.rel (0) target = $region21
  $region20: #{resgcn_forward.3} parent=0 // pred_region
    _
  $region21: #{resgcn_forward.3} parent=0 // pred_fallthru
    _

</llo_original>
